<compile_context>
chip_gen: v5e
topology: v5e:2x2
jax: 0.10.0
libtpu: 0.0.40
codegen_flags: <defaults>
</compile_context>

<pallas_src>
import functools

import jax
import jax.numpy as jnp
from jax.experimental import pallas as pl
from jax.experimental.pallas import tpu as pltpu


INPUT_SIZE = 45
HIDDEN1 = 64
HIDDEN2 = 64
OUTPUT_SIZE = 5

F_PAD = 64     # input features padded 45 -> 64 (lane-aligned K)
OUT_PAD = 128  # output padded 5 -> 128 (lane-dense stores, full-width MXU pass)
MAX_TB = 512   # batch tile (sized well inside v7x's 64 MiB VMEM)


def _mlp_kernel(x_ref, w1_ref, b1_ref, w2_ref, b2_ref, w3_ref, b3_ref, o_ref):
    # Layer 1: Linear + ReLU   ([TB, 64] x [64, 64])
    h1 = jnp.dot(x_ref[...], w1_ref[...], preferred_element_type=jnp.float32)
    h1 = jnp.maximum(h1 + b1_ref[...], 0.0)
    # Layer 2: Linear + ReLU   ([TB, 64] x [64, 64])
    h2 = jnp.dot(h1, w2_ref[...], preferred_element_type=jnp.float32)
    h2 = jnp.maximum(h2 + b2_ref[...], 0.0)
    # Layer 3: Linear + Sigmoid ([TB, 64] x [64, 128], lane-dense store)
    z = jnp.dot(h2, w3_ref[...], preferred_element_type=jnp.float32)
    o_ref[...] = jax.nn.sigmoid(z + b3_ref[...])


@functools.partial(jax.jit, static_argnames=())
def neural_network_forward(x, params):
    """x: [B, 45] float32 -> [B, 5] float32."""
    w1, b1, w2, b2, w3, b3 = params
    B = x.shape[0]

    # ---- choose batch tile and pad batch to a multiple of it ----------------
    if B < MAX_TB:
        tb = max(8, ((B + 7) // 8) * 8)   # round tiny batches up to sublane mult
    else:
        tb = MAX_TB
    b_pad = ((B + tb - 1) // tb) * tb
    num_tiles = b_pad // tb

    # ---- zero-pad operands (numerically exact; padding is sliced off) -------
    x_p = jnp.zeros((b_pad, F_PAD), jnp.float32).at[:B, :INPUT_SIZE].set(x)
    w1_p = jnp.zeros((F_PAD, HIDDEN1), jnp.float32).at[:INPUT_SIZE, :].set(w1)
    w3_p = jnp.zeros((HIDDEN2, OUT_PAD), jnp.float32).at[:, :OUTPUT_SIZE].set(w3)
    b3_p = jnp.zeros((1, OUT_PAD), jnp.float32).at[:, :OUTPUT_SIZE].set(b3)

    weight_bytes = 4 * (F_PAD * HIDDEN1 + HIDDEN1 + HIDDEN1 * HIDDEN2 + HIDDEN2
                        + HIDDEN2 * OUT_PAD + OUT_PAD)
    cost = pl.CostEstimate(
        flops=2 * b_pad * (F_PAD * HIDDEN1 + HIDDEN1 * HIDDEN2 + HIDDEN2 * OUT_PAD),
        transcendentals=b_pad * OUT_PAD,
        bytes_accessed=b_pad * (F_PAD + OUT_PAD) * 4 + weight_bytes,
    )

    const = lambda shape: pl.BlockSpec(shape, lambda i: (0, 0))

    out_padded = pl.pallas_call(
        _mlp_kernel,
        out_shape=jax.ShapeDtypeStruct((b_pad, OUT_PAD), jnp.float32),
        grid=(num_tiles,),
        in_specs=[
            pl.BlockSpec((tb, F_PAD), lambda i: (i, 0)),   # x tile, pipelined
            const((F_PAD, HIDDEN1)),                       # w1 (VMEM-resident)
            const((1, HIDDEN1)),                           # b1
            const((HIDDEN1, HIDDEN2)),                     # w2
            const((1, HIDDEN2)),                           # b2
            const((HIDDEN2, OUT_PAD)),                     # w3 (padded)
            const((1, OUT_PAD)),                           # b3 (padded)
        ],
        out_specs=pl.BlockSpec((tb, OUT_PAD), lambda i: (i, 0)),
        compiler_params=pltpu.CompilerParams(
            dimension_semantics=("parallel",),   # megacore sharding on v7x
            vmem_limit_bytes=64 << 20,
        ),
        cost_estimate=cost,
    )(x_p, w1_p, b1, w2, b2, w3_p, b3_p)

    return out_padded[:B, :OUTPUT_SIZE]


def init_params(key):
    """Deterministic init mimicking PyTorch's default Linear init:
    U(-1/sqrt(fan_in), 1/sqrt(fan_in)). Weights stored as [in, out]."""
    ks = jax.random.split(key, 6)

    def linear(kw, kb, fan_in, fan_out):
        bound = 1.0 / jnp.sqrt(jnp.float32(fan_in))
        w = jax.random.uniform(kw, (fan_in, fan_out), jnp.float32, -bound, bound)
        b = jax.random.uniform(kb, (1, fan_out), jnp.float32, -bound, bound)
        return w, b

    w1, b1 = linear(ks[0], ks[1], INPUT_SIZE, HIDDEN1)
    w2, b2 = linear(ks[2], ks[3], HIDDEN1, HIDDEN2)
    w3, b3 = linear(ks[4], ks[5], HIDDEN2, OUTPUT_SIZE)
    return (w1, b1, w2, b2, w3, b3)


def _reference_forward(x, params):
    w1, b1, w2, b2, w3, b3 = params
    h1 = jnp.maximum(x @ w1 + b1, 0.0)
    h2 = jnp.maximum(h1 @ w2 + b2, 0.0)
    return jax.nn.sigmoid(h2 @ w3 + b3)


if __name__ == "__main__":
    key = jax.random.PRNGKey(0)
    k_params, k_x = jax.random.split(key)

    params = init_params(k_params)

    # Small batch (12 exercises the batch-padding + output-slice path).
    x = jax.random.normal(k_x, (12, INPUT_SIZE), jnp.float32)

    out = neural_network_forward(x, params)
    out = jax.block_until_ready(out)

    ref = _reference_forward(x, params)
    assert out.shape == (12, OUTPUT_SIZE), out.shape
    assert jnp.allclose(out, ref, atol=1e-5, rtol=1e-5)

    print("KERNEL_OK")
</pallas_src>

<mosaic_0001>
module attributes {stable_mosaic.version = 11 : i64} {
  func.func @_mlp_kernel(%arg0: i32, %arg1: memref<16x64xf32, #tpu.memory_space<vmem>>, %arg2: memref<64x64xf32, #tpu.memory_space<vmem>>, %arg3: memref<1x64xf32, #tpu.memory_space<vmem>>, %arg4: memref<64x64xf32, #tpu.memory_space<vmem>>, %arg5: memref<1x64xf32, #tpu.memory_space<vmem>>, %arg6: memref<64x128xf32, #tpu.memory_space<vmem>>, %arg7: memref<1x128xf32, #tpu.memory_space<vmem>>, %arg8: memref<16x128xf32, #tpu.memory_space<vmem>>) attributes {dimension_semantics = [#tpu.dimension_semantics<parallel>], iteration_bounds = array<i64: 1>, scalar_prefetch = 0 : i64, scratch_operands = 0 : i64, tpu.core_type = #tpu.core_type<tc>, window_params = [{transform_indices = @transform_0, window_bounds = array<i64: 16, 64>}, {pipeline_mode = #tpu.pipeline_mode<synchronous>, transform_indices = @transform_1, window_bounds = array<i64: 64, 64>}, {pipeline_mode = #tpu.pipeline_mode<synchronous>, transform_indices = @transform_2, window_bounds = array<i64: 1, 64>}, {pipeline_mode = #tpu.pipeline_mode<synchronous>, transform_indices = @transform_3, window_bounds = array<i64: 64, 64>}, {pipeline_mode = #tpu.pipeline_mode<synchronous>, transform_indices = @transform_4, window_bounds = array<i64: 1, 64>}, {pipeline_mode = #tpu.pipeline_mode<synchronous>, transform_indices = @transform_5, window_bounds = array<i64: 64, 128>}, {pipeline_mode = #tpu.pipeline_mode<synchronous>, transform_indices = @transform_6, window_bounds = array<i64: 1, 128>}, {transform_indices = @transform_7, window_bounds = array<i64: 16, 128>}]} {
    %c0 = arith.constant 0 : index
    %c0_0 = arith.constant 0 : index
    %0 = vector.load %arg1[%c0, %c0_0] : memref<16x64xf32, #tpu.memory_space<vmem>>, vector<16x64xf32>
    %c0_1 = arith.constant 0 : index
    %c0_2 = arith.constant 0 : index
    %1 = vector.load %arg2[%c0_1, %c0_2] : memref<64x64xf32, #tpu.memory_space<vmem>>, vector<64x64xf32>
    %cst = arith.constant dense<0.000000e+00> : vector<16x64xf32>
    %2 = tpu.matmul %0, %1, %cst {dimension_numbers = #tpu.dot_dimension_numbers<[1], [0], [0], [1], [0, 0, 1, 1], [], []>} : vector<16x64xf32>, vector<64x64xf32>, vector<16x64xf32> -> vector<16x64xf32>
    %c0_3 = arith.constant 0 : index
    %c0_4 = arith.constant 0 : index
    %3 = vector.load %arg3[%c0_3, %c0_4] : memref<1x64xf32, #tpu.memory_space<vmem>>, vector<1x64xf32>
    %4 = vector.broadcast %3 : vector<1x64xf32> to vector<16x64xf32>
    %5 = arith.addf %2, %4 : vector<16x64xf32>
    %cst_5 = arith.constant 0.000000e+00 : f32
    %6 = vector.broadcast %cst_5 : f32 to vector<16x64xf32>
    %7 = arith.maximumf %5, %6 : vector<16x64xf32>
    %c0_6 = arith.constant 0 : index
    %c0_7 = arith.constant 0 : index
    %8 = vector.load %arg4[%c0_6, %c0_7] : memref<64x64xf32, #tpu.memory_space<vmem>>, vector<64x64xf32>
    %cst_8 = arith.constant dense<0.000000e+00> : vector<16x64xf32>
    %9 = tpu.matmul %7, %8, %cst_8 {dimension_numbers = #tpu.dot_dimension_numbers<[1], [0], [0], [1], [0, 0, 1, 1], [], []>} : vector<16x64xf32>, vector<64x64xf32>, vector<16x64xf32> -> vector<16x64xf32>
    %c0_9 = arith.constant 0 : index
    %c0_10 = arith.constant 0 : index
    %10 = vector.load %arg5[%c0_9, %c0_10] : memref<1x64xf32, #tpu.memory_space<vmem>>, vector<1x64xf32>
    %11 = vector.broadcast %10 : vector<1x64xf32> to vector<16x64xf32>
    %12 = arith.addf %9, %11 : vector<16x64xf32>
    %cst_11 = arith.constant 0.000000e+00 : f32
    %13 = vector.broadcast %cst_11 : f32 to vector<16x64xf32>
    %14 = arith.maximumf %12, %13 : vector<16x64xf32>
    %c0_12 = arith.constant 0 : index
    %c0_13 = arith.constant 0 : index
    %15 = vector.load %arg6[%c0_12, %c0_13] : memref<64x128xf32, #tpu.memory_space<vmem>>, vector<64x128xf32>
    %cst_14 = arith.constant dense<0.000000e+00> : vector<16x128xf32>
    %16 = tpu.matmul %14, %15, %cst_14 {dimension_numbers = #tpu.dot_dimension_numbers<[1], [0], [0], [1], [0, 0, 1, 1], [], []>} : vector<16x64xf32>, vector<64x128xf32>, vector<16x128xf32> -> vector<16x128xf32>
    %c0_15 = arith.constant 0 : index
    %c0_16 = arith.constant 0 : index
    %17 = vector.load %arg7[%c0_15, %c0_16] : memref<1x128xf32, #tpu.memory_space<vmem>>, vector<1x128xf32>
    %18 = vector.broadcast %17 : vector<1x128xf32> to vector<16x128xf32>
    %19 = arith.addf %16, %18 : vector<16x128xf32>
    %20 = arith.negf %19 : vector<16x128xf32>
    %21 = math.exp %20 : vector<16x128xf32>
    %cst_17 = arith.constant 1.000000e+00 : f32
    %22 = vector.broadcast %cst_17 : f32 to vector<16x128xf32>
    %23 = arith.addf %22, %21 : vector<16x128xf32>
    %24 = arith.divf %22, %23 : vector<16x128xf32>
    %c0_18 = arith.constant 0 : index
    %c0_19 = arith.constant 0 : index
    %25 = vector.load %arg8[%c0_18, %c0_19] : memref<16x128xf32, #tpu.memory_space<vmem>>, vector<16x128xf32>
    tpu.vector_store %arg8[%c0_18, %c0_19], %24 {strides = array<i32>} : memref<16x128xf32, #tpu.memory_space<vmem>>, vector<16x128xf32>,
    return
  }
  func.func @transform_0(%arg0: i32) -> (i32, i32) {
    %c0_i32 = arith.constant 0 : i32
    %c0_i32_0 = arith.constant 0 : i32
    return %arg0, %c0_i32 : i32, i32
  }
  func.func @transform_1(%arg0: i32) -> (i32, i32) {
    %c0_i32 = arith.constant 0 : i32
    %c0_i32_0 = arith.constant 0 : i32
    %c0_i32_1 = arith.constant 0 : i32
    return %c0_i32, %c0_i32_0 : i32, i32
  }
  func.func @transform_2(%arg0: i32) -> (i32, i32) {
    %c0_i32 = arith.constant 0 : i32
    %c0_i32_0 = arith.constant 0 : i32
    %c0_i32_1 = arith.constant 0 : i32
    return %c0_i32, %c0_i32_0 : i32, i32
  }
  func.func @transform_3(%arg0: i32) -> (i32, i32) {
    %c0_i32 = arith.constant 0 : i32
    %c0_i32_0 = arith.constant 0 : i32
    %c0_i32_1 = arith.constant 0 : i32
    return %c0_i32, %c0_i32_0 : i32, i32
  }
  func.func @transform_4(%arg0: i32) -> (i32, i32) {
    %c0_i32 = arith.constant 0 : i32
    %c0_i32_0 = arith.constant 0 : i32
    %c0_i32_1 = arith.constant 0 : i32
    return %c0_i32, %c0_i32_0 : i32, i32
  }
  func.func @transform_5(%arg0: i32) -> (i32, i32) {
    %c0_i32 = arith.constant 0 : i32
    %c0_i32_0 = arith.constant 0 : i32
    %c0_i32_1 = arith.constant 0 : i32
    return %c0_i32, %c0_i32_0 : i32, i32
  }
  func.func @transform_6(%arg0: i32) -> (i32, i32) {
    %c0_i32 = arith.constant 0 : i32
    %c0_i32_0 = arith.constant 0 : i32
    %c0_i32_1 = arith.constant 0 : i32
    return %c0_i32, %c0_i32_0 : i32, i32
  }
  func.func @transform_7(%arg0: i32) -> (i32, i32) {
    %c0_i32 = arith.constant 0 : i32
    %c0_i32_0 = arith.constant 0 : i32
    return %arg0, %c0_i32 : i32, i32
  }
}

</mosaic_0001>

<llo_original>
// kernel: neural_network_forward.1
$region0: #{neural_network_forward.1}
  #allocation0 [shape = 'u32[]', space=smem, size = 0x4, offset = 0x4, fixed_abs, tag = 'smem constant byte address 0x4 - core index']
  #allocation1 [shape = 'u32[72,128]{1,0:T(1,128)}', space=vmem, size = 0x9000, scoped, tag = 'internal scratch']
  %s0 = inlined_call_operand.vmem [shape: f32[16,64], index: 0, kind: input, shape index: {}]
  %s1 = inlined_call_operand.vmem [shape: f32[64,64], index: 1, kind: input, shape index: {}]
  %s2 = inlined_call_operand.vmem [shape: f32[1,64], index: 2, kind: input, shape index: {}]
  %s3 = inlined_call_operand.vmem [shape: f32[64,64], index: 3, kind: input, shape index: {}]
  %s4 = inlined_call_operand.vmem [shape: f32[1,64], index: 4, kind: input, shape index: {}]
  %s5 = inlined_call_operand.vmem [shape: f32[64,128], index: 5, kind: input, shape index: {}]
  %s6 = inlined_call_operand.vmem [shape: f32[1,128], index: 6, kind: input, shape index: {}]
  %s7 = inlined_call_operand.vmem [shape: f32[16,128], index: 7, kind: output, shape index: {}]
  %s8 = sld [smem:[#allocation0]]
  $region38: #{neural_network_forward.1} parent=0
    _
  %s10 = ssub.s32 1, %s8
  %s11 = scalar_select 0, %s10, %s8
  // Predicated region
  $region2: #{neural_network_forward.1} parent=0 // pred_check
    _
  $region3: #{neural_network_forward.1} parent=0 // pred_check_branch
    %13 = sbr.rel (0) target = $region5
  $region4: #{neural_network_forward.1} parent=0 // pred_region
    _
  $region5: #{neural_network_forward.1} parent=0 // pred_fallthru
    _
  // Predicated region
  $region6: #{neural_network_forward.1} parent=0 // pred_check
    _
  $region7: #{neural_network_forward.1} parent=0 // pred_check_branch
    %15 = sbr.rel (0) target = $region9
  $region8: #{neural_network_forward.1} parent=0 // pred_region
    _
  $region9: #{neural_network_forward.1} parent=0 // pred_fallthru
    _
  // Predicated region
  $region10: #{neural_network_forward.1} parent=0 // pred_check
    _
  $region11: #{neural_network_forward.1} parent=0 // pred_check_branch
    %17 = sbr.rel (0) target = $region13
  $region12: #{neural_network_forward.1} parent=0 // pred_region
    _
  $region13: #{neural_network_forward.1} parent=0 // pred_fallthru
    _
  // Predicated region
  $region14: #{neural_network_forward.1} parent=0 // pred_check
    _
  $region15: #{neural_network_forward.1} parent=0 // pred_check_branch
    %19 = sbr.rel (0) target = $region17
  $region16: #{neural_network_forward.1} parent=0 // pred_region
    _
  $region17: #{neural_network_forward.1} parent=0 // pred_fallthru
    _
  // Predicated region
  $region18: #{neural_network_forward.1} parent=0 // pred_check
    _
  $region19: #{neural_network_forward.1} parent=0 // pred_check_branch
    %21 = sbr.rel (0) target = $region21
  $region20: #{neural_network_forward.1} parent=0 // pred_region
    _
  $region21: #{neural_network_forward.1} parent=0 // pred_fallthru
    _
  // Predicated region
  $region22: #{neural_network_forward.1} parent=0 // pred_check
    _
  $region23: #{neural_network_forward.1} parent=0 // pred_check_branch
    %23 = sbr.rel (0) target = $region25
  $region24: #{neural_network_forward.1} parent=0 // pred_region
    _
  $region25: #{neural_network_forward.1} parent=0 // pred_fallthru
    _
  // Predicated region
  $region26: #{neural_network_forward.1} parent=0 // pred_check
    _
  $region27: #{neural_network_forward.1} parent=0 // pred_check_branch
    %25 = sbr.rel (0) target = $region29
  $region28: #{neural_network_forward.1} parent=0 // pred_region
    _
  $region29: #{neural_network_forward.1} parent=0 // pred_fallthru
    _
  %v26 = vld [vmem:[%s0] sm:$0xff]
  %v27 = vld [vmem:[%s0 + $0x8] sm:$0xff]
  %v28 = vld [vmem:[%s1] sm:$0xff]
  %v29 = vld [vmem:[%s1 + $0x8] sm:$0xff]
  %v30 = vld [vmem:[%s1 + $0x10] sm:$0xff]
  %v31 = vld [vmem:[%s1 + $0x18] sm:$0xff]
  %v32 = vld [vmem:[%s1 + $0x20] sm:$0xff]
  %v33 = vld [vmem:[%s1 + $0x28] sm:$0xff]
  %v34 = vld [vmem:[%s1 + $0x30] sm:$0xff]
  %v35 = vld [vmem:[%s1 + $0x38] sm:$0xff]
  %v36 = vld [vmem:[%s2] sm:$0x1]
  %v38 = vperm.slane %v36, 0
  %vm40 = vcmask 523264
  %v42 = vsel %vm40, %v26, 0
  %v45 = vsel %vm40, %v27, 0
  %47 = vmatpush.msra.mxu0 0.0
  %48 = vmatpush.msra.mxu0 0.0
  %49 = vmatpush.msra.mxu0 0.0
  %50 = vmatpush.msra.mxu0 0.0
  %51 = vmatpush.msra.mxu0 0.0
  %52 = vmatpush.msra.mxu0 0.0
  %53 = vmatpush.msra.mxu0 0.0
  %54 = vmatpush.msra.mxu0 0.0
  %55 = vmatpush.msra.mxu0 %v35
  %56 = vmatpush.msra.mxu0 %v34
  %57 = vmatpush.msra.mxu0 %v33
  %58 = vmatpush.msra.mxu0 %v32
  %59 = vmatpush.msra.mxu0 %v31
  %60 = vmatpush.msra.mxu0 %v30
  %61 = vmatpush.msra.mxu0 %v29
  %62 = vmatpush.msra.mxu0 %v28
  %63 = vmatmul.f32.gmra.mxu0 %v42
  %v64 = vpop.f32.mrf.mxu0
  %v65 = vadd.f32 %v38, %v64
  %66 = vmatmul.f32.gmra.mxu0 %v45
  %v67 = vpop.f32.mrf.mxu0
  %v68 = vadd.f32 %v38, %v67
  %69 = vdwg.mxu0
  %v70 = vmax.f32 %v65, 0.0
  %v71 = vmax.f32 %v68, 0.0
  %v72 = vld [vmem:[%s3] sm:$0xff]
  %v73 = vld [vmem:[%s3 + $0x8] sm:$0xff]
  %v74 = vld [vmem:[%s3 + $0x10] sm:$0xff]
  %v75 = vld [vmem:[%s3 + $0x18] sm:$0xff]
  %v76 = vld [vmem:[%s3 + $0x20] sm:$0xff]
  %v77 = vld [vmem:[%s3 + $0x28] sm:$0xff]
  %v78 = vld [vmem:[%s3 + $0x30] sm:$0xff]
  %v79 = vld [vmem:[%s3 + $0x38] sm:$0xff]
  %v80 = vld [vmem:[%s4] sm:$0x1]
  %v82 = vperm.slane %v80, 0
  %v85 = vsel %vm40, %v70, 0
  %v88 = vsel %vm40, %v71, 0
  %90 = vmatpush.msra.mxu0 0.0
  %91 = vmatpush.msra.mxu0 0.0
  %92 = vmatpush.msra.mxu0 0.0
  %93 = vmatpush.msra.mxu0 0.0
  %94 = vmatpush.msra.mxu0 0.0
  %95 = vmatpush.msra.mxu0 0.0
  %96 = vmatpush.msra.mxu0 0.0
  %97 = vmatpush.msra.mxu0 0.0
  %98 = vmatpush.msra.mxu0 %v79
  %99 = vmatpush.msra.mxu0 %v78
  %100 = vmatpush.msra.mxu0 %v77
  %101 = vmatpush.msra.mxu0 %v76
  %102 = vmatpush.msra.mxu0 %v75
  %103 = vmatpush.msra.mxu0 %v74
  %104 = vmatpush.msra.mxu0 %v73
  %105 = vmatpush.msra.mxu0 %v72
  %106 = vmatmul.f32.gmra.mxu0 %v85
  %v107 = vpop.f32.mrf.mxu0
  %v108 = vadd.f32 %v82, %v107
  %109 = vmatmul.f32.gmra.mxu0 %v88
  %v110 = vpop.f32.mrf.mxu0
  %v111 = vadd.f32 %v82, %v110
  %112 = vdwg.mxu0
  %v113 = vmax.f32 %v108, 0.0
  %v114 = vmax.f32 %v111, 0.0
  %v115 = vld [vmem:[%s5] sm:$0xff]
  %v116 = vld [vmem:[%s5 + $0x8] sm:$0xff]
  %v117 = vld [vmem:[%s5 + $0x10] sm:$0xff]
  %v118 = vld [vmem:[%s5 + $0x18] sm:$0xff]
  %v119 = vld [vmem:[%s5 + $0x20] sm:$0xff]
  %v120 = vld [vmem:[%s5 + $0x28] sm:$0xff]
  %v121 = vld [vmem:[%s5 + $0x30] sm:$0xff]
  %v122 = vld [vmem:[%s5 + $0x38] sm:$0xff]
  %v123 = vld [vmem:[%s6] sm:$0x1]
  %v125 = vperm.slane %v123, 0
  %v128 = vsel %vm40, %v113, 0
  %v131 = vsel %vm40, %v114, 0
  %133 = vmatpush.msra.mxu0 0.0
  %134 = vmatpush.msra.mxu0 0.0
  %135 = vmatpush.msra.mxu0 0.0
  %136 = vmatpush.msra.mxu0 0.0
  %137 = vmatpush.msra.mxu0 0.0
  %138 = vmatpush.msra.mxu0 0.0
  %139 = vmatpush.msra.mxu0 0.0
  %140 = vmatpush.msra.mxu0 0.0
  %141 = vmatpush.msra.mxu0 %v122
  %142 = vmatpush.msra.mxu0 %v121
  %143 = vmatpush.msra.mxu0 %v120
  %144 = vmatpush.msra.mxu0 %v119
  %145 = vmatpush.msra.mxu0 %v118
  %146 = vmatpush.msra.mxu0 %v117
  %147 = vmatpush.msra.mxu0 %v116
  %148 = vmatpush.msra.mxu0 %v115
  %149 = vmatmul.f32.gmra.mxu0 %v128
  %v150 = vpop.f32.mrf.mxu0
  %v151 = vadd.f32 %v125, %v150
  %152 = vmatmul.f32.gmra.mxu0 %v131
  %v153 = vpop.f32.mrf.mxu0
  %v154 = vadd.f32 %v125, %v153
  %155 = vdwg.mxu0
  %v156 = vxor.u32 %v151, 2147483648
  %v157 = vxor.u32 %v154, 2147483648
  %v158 = vmul.f32 %v156, 1.442695
  %v159 = vpow.pop %v158
  %v160 = vmul.f32 %v157, 1.442695
  %v161 = vpow.pop %v160
  %v162 = vadd.f32 %v159, 1.0
  %v163 = vadd.f32 %v161, 1.0
  %v164 = vrcp.pop %v162
  %v165 = vmul.f32 %v162, %v164
  %v166 = vsub.f32 1.0, %v165
  %v167 = vmul.f32 %v164, %v166
  %v168 = vadd.f32 %v164, %v167
  %vm169 = vweird.f32 %v162
  %vm170 = vweird.f32 %v164
  %vm171 = vmor %vm169, %vm170
  %v172 = vsel %vm171, %v164, %v168
  %v173 = vand.u32 2147483647, %v162
  %vm174 = vcmp.eq.f32.partialorder %v173, 8.507059e+37
  %v175 = vand.u32 %v162, 2147483648
  %v176 = vor.u32 1.1754944e-38, %v175
  %v177 = vsel %vm174, %v176, %v172
  %v178 = vmul.f32 1.0, %v177
  %v179 = vrcp.pop %v163
  %v180 = vmul.f32 %v163, %v179
  %v181 = vsub.f32 1.0, %v180
  %v182 = vmul.f32 %v179, %v181
  %v183 = vadd.f32 %v179, %v182
  %vm184 = vweird.f32 %v163
  %vm185 = vweird.f32 %v179
  %vm186 = vmor %vm184, %vm185
  %v187 = vsel %vm186, %v179, %v183
  %v188 = vand.u32 2147483647, %v163
  %vm189 = vcmp.eq.f32.partialorder %v188, 8.507059e+37
  %v190 = vand.u32 %v163, 2147483648
  %v191 = vor.u32 1.1754944e-38, %v190
  %v192 = vsel %vm189, %v191, %v187
  %v193 = vmul.f32 1.0, %v192
  %194 = vst [vmem:[%s7] sm:$0xff] %v178
  %195 = vst [vmem:[%s7 + $0x8] sm:$0xff] %v193
  // Predicated region
  $region30: #{neural_network_forward.1} parent=0 // pred_check
    _
  $region31: #{neural_network_forward.1} parent=0 // pred_check_branch
    %197 = sbr.rel (0) target = $region33
  $region32: #{neural_network_forward.1} parent=0 // pred_region
    _
  $region33: #{neural_network_forward.1} parent=0 // pred_fallthru
    _
  // Predicated region
  $region34: #{neural_network_forward.1} parent=0 // pred_check
    _
  $region35: #{neural_network_forward.1} parent=0 // pred_check_branch
    %199 = sbr.rel (0) target = $region37
  $region36: #{neural_network_forward.1} parent=0 // pred_region
    _
  $region37: #{neural_network_forward.1} parent=0 // pred_fallthru
    _

</llo_original>
